<compile_context>
chip_gen: v7x
topology: tpu7x:2x2x1
jax: 0.10.0
libtpu: 0.0.40
codegen_flags: <defaults>
</compile_context>

<pallas_src>
import functools

import jax
import jax.numpy as jnp
import numpy as np
from jax.experimental import pallas as pl
from jax.experimental.pallas import tpu as pltpu


def _round_up(x, m):
    return (x + m - 1) // m * m


# ----------------------------- Pallas kernel --------------------------------

def _diag_linear_kernel(x_ref, vsel_ref, o_ref, *, shifts):
    """One (tm, N) tile of out = sum_i roll(x * vsel[i], shift=i, axis=-1).

    x_ref    : (tm, N)  tile of the input (streamed over batch)
    vsel_ref : (K, N)   alpha-scaled rows of V for the K active diagonals (grid-resident)
    o_ref    : (tm, N)  tile of the output
    """
    x = x_ref[...].astype(jnp.float32)
    acc = None
    for idx, shift in enumerate(shifts):             # K is tiny and static -> fully unrolled
        row = vsel_ref[idx:idx + 1, :].astype(jnp.float32)   # (1, N), broadcast over sublanes
        y = x * row                                  # VPU multiply
        if shift:
            y = pltpu.roll(y, shift=shift, axis=1)   # XLU circular lane rotation over N
        acc = y if acc is None else acc + y          # VPU add
    o_ref[...] = acc.astype(o_ref.dtype)


def _choose_tm(B, N, x_bytes, o_bytes, budget_bytes=16 << 20, tm_cap=1024):
    """Largest power-of-two batch tile whose double-buffered in+out tiles fit the budget."""
    per_row = N * (2 * x_bytes + 2 * o_bytes)        # 2x for double buffering of in and out
    tm = tm_cap
    while tm > 8 and tm * per_row > budget_bytes:
        tm //= 2
    tm = max(8, tm)
    return min(tm, _round_up(B, 8))


def diag_linear(x, vsel, shifts, *, tm=None):
    """out[b, r] = sum_i x[b, (r - shifts[i]) % N] * vsel[i, (r - shifts[i]) % N]."""
    B, N = x.shape
    K, N2 = vsel.shape
    shifts = tuple(int(s) % N for s in shifts)
    assert N == N2 and K == len(shifts) and K >= 1
    assert N % 128 == 0, "out_features must be a multiple of 128 (full-N lane rolls)"

    if tm is None:
        tm = _choose_tm(B, N, x.dtype.itemsize, x.dtype.itemsize)
    B_pad = _round_up(B, tm)
    if B_pad != B:
        x = jnp.pad(x, ((0, B_pad - B), (0, 0)))     # tail handled by padding, sliced off below

    grid = (B_pad // tm,)
    out = pl.pallas_call(
        functools.partial(_diag_linear_kernel, shifts=shifts),
        out_shape=jax.ShapeDtypeStruct((B_pad, N), x.dtype),
        grid_spec=pltpu.PrefetchScalarGridSpec(
            num_scalar_prefetch=0,
            grid=grid,
            in_specs=[
                pl.BlockSpec((tm, N), lambda i: (i, 0)),   # x tile, streamed over batch
                pl.BlockSpec((K, N), lambda i: (0, 0)),    # vsel: constant block -> VMEM resident
            ],
            out_specs=pl.BlockSpec((tm, N), lambda i: (i, 0)),  # lane-dense (N % 128 == 0)
        ),
        compiler_params=pltpu.CompilerParams(
            dimension_semantics=("parallel",),
            vmem_limit_bytes=32 << 20),
    )(x, vsel)
    return out[:B] if B_pad != B else out


# -------------------------- Module-equivalent glue ---------------------------

class CustomFullyConnectedLayer:
    """JAX/Pallas port of the PyTorch CustomFullyConnectedLayer."""

    def __init__(self, in_features, out_features, key, K=1, diagPos=()):
        self.in_features = in_features
        self.out_features = out_features
        self.K = K
        self.num_permutations = in_features
        # Deterministic "randn" init for V (out_features, out_features).
        self.V = jax.random.normal(key, (out_features, out_features), dtype=jnp.float32)
        alpha = np.zeros((self.num_permutations,), dtype=np.float32)
        for i in diagPos:
            alpha[int(i)] = 1.0
        self.alpha = jnp.asarray(alpha)
        # Active diagonals = nonzero alpha entries (deduplicated, sorted), like torch.nonzero.
        self.diag_idx = tuple(int(i) for i in np.nonzero(alpha)[0])
        idx = jnp.asarray(self.diag_idx, dtype=jnp.int32)
        # Pre-scale the K relevant rows of V by alpha once (tiny: K x N); kernel never sees W.
        self.vsel = self.V[idx, :] * self.alpha[idx][:, None]

    def compute_weights(self):
        """Dense reference: W[(c+i) % n, c] = alpha[i] * V[i, c].  Used for testing only."""
        n = self.out_features
        W = jnp.zeros((n, n), dtype=jnp.float32)
        for i in self.diag_idx:
            W = W + self.alpha[i] * jnp.roll(jnp.diag(self.V[i]), shift=i, axis=0)
        return W

    @property
    def weights(self):
        return self.compute_weights()

    def forward(self, x, *, check_nnz=False):
        if check_nnz:
            # TODO(synk): original asserts torch.sum(W != 0) == K * 3072 (hardcoded 3072) and
            # forces a device->host sync; kept off the hot path behind this debug flag.
            nnz = int(jnp.sum(self.compute_weights() != 0))
            assert nnz == self.K * self.out_features, (nnz, self.K * self.out_features)
        return diag_linear(x, self.vsel, self.diag_idx)

    __call__ = forward


# ----------------------------------- main ------------------------------------

if __name__ == "__main__":
    key = jax.random.PRNGKey(0)
    k_v, k_x = jax.random.split(key)

    # Small shapes consistent with the module (F.linear(x, W) with square W (N, N)
    # requires x's last dim == out_features).
    B = 8
    N = 256                      # in_features == out_features (CIFAR-flat analogue of 3072)
    K = 2
    diagPos = [3, 17]

    layer = CustomFullyConnectedLayer(N, N, k_v, K=K, diagPos=diagPos)
    x = jax.random.normal(k_x, (B, N), dtype=jnp.float32)

    out = layer(x)
    out = jax.block_until_ready(out)

    # Numerical check against the dense-W reference of the same semantics.
    ref = x @ layer.compute_weights().T
    np.testing.assert_allclose(np.asarray(out), np.asarray(ref), rtol=1e-5, atol=1e-5)

    print("KERNEL_OK")
</pallas_src>

<mosaic_0001>
module attributes {stable_mosaic.version = 11 : i64} {
  func.func @_diag_linear_kernel(%arg0: i32, %arg1: memref<8x256xf32, #tpu.memory_space<vmem>>, %arg2: memref<2x256xf32, #tpu.memory_space<vmem>>, %arg3: memref<8x256xf32, #tpu.memory_space<vmem>>) attributes {dimension_semantics = [#tpu.dimension_semantics<parallel>], iteration_bounds = array<i64: 1>, scalar_prefetch = 0 : i64, scratch_operands = 0 : i64, tpu.core_type = #tpu.core_type<tc>, window_params = [{transform_indices = @transform_0, window_bounds = array<i64: 8, 256>}, {pipeline_mode = #tpu.pipeline_mode<synchronous>, transform_indices = @transform_1, window_bounds = array<i64: 2, 256>}, {transform_indices = @transform_2, window_bounds = array<i64: 8, 256>}]} {
    %c0 = arith.constant 0 : index
    %c0_0 = arith.constant 0 : index
    %0 = vector.load %arg1[%c0, %c0_0] : memref<8x256xf32, #tpu.memory_space<vmem>>, vector<8x256xf32>
    %c0_1 = arith.constant 0 : index
    %c0_2 = arith.constant 0 : index
    %1 = vector.load %arg2[%c0_1, %c0_2] : memref<2x256xf32, #tpu.memory_space<vmem>>, vector<1x256xf32>
    %2 = vector.broadcast %1 : vector<1x256xf32> to vector<8x256xf32>
    %3 = arith.mulf %0, %2 : vector<8x256xf32>
    %c3_i32 = arith.constant 3 : i32
    %4 = tpu.dynamic_rotate %3 by %c3_i32 dim 1 : vector<8x256xf32>, i32 -> vector<8x256xf32>
    %c1 = arith.constant 1 : index
    %c0_3 = arith.constant 0 : index
    %5 = vector.load %arg2[%c1, %c0_3] : memref<2x256xf32, #tpu.memory_space<vmem>>, vector<1x256xf32>
    %6 = vector.broadcast %5 : vector<1x256xf32> to vector<8x256xf32>
    %7 = arith.mulf %0, %6 : vector<8x256xf32>
    %c17_i32 = arith.constant 17 : i32
    %8 = tpu.dynamic_rotate %7 by %c17_i32 dim 1 : vector<8x256xf32>, i32 -> vector<8x256xf32>
    %9 = arith.addf %4, %8 : vector<8x256xf32>
    %c0_4 = arith.constant 0 : index
    %c0_5 = arith.constant 0 : index
    %10 = vector.load %arg3[%c0_4, %c0_5] : memref<8x256xf32, #tpu.memory_space<vmem>>, vector<8x256xf32>
    tpu.vector_store %arg3[%c0_4, %c0_5], %9 {strides = array<i32>} : memref<8x256xf32, #tpu.memory_space<vmem>>, vector<8x256xf32>,
    return
  }
  func.func @transform_0(%arg0: i32) -> (i32, i32) {
    %c0_i32 = arith.constant 0 : i32
    %c0_i32_0 = arith.constant 0 : i32
    return %arg0, %c0_i32 : i32, i32
  }
  func.func @transform_1(%arg0: i32) -> (i32, i32) {
    %c0_i32 = arith.constant 0 : i32
    %c0_i32_0 = arith.constant 0 : i32
    %c0_i32_1 = arith.constant 0 : i32
    return %c0_i32, %c0_i32_0 : i32, i32
  }
  func.func @transform_2(%arg0: i32) -> (i32, i32) {
    %c0_i32 = arith.constant 0 : i32
    %c0_i32_0 = arith.constant 0 : i32
    return %arg0, %c0_i32 : i32, i32
  }
}

</mosaic_0001>

<llo_original>
// kernel: tpu_custom_call.1
$region0: #{tpu_custom_call.1}
  #allocation0 [shape = 'u32[]', space=smem, size = 0x4, offset = 0x4, fixed_abs, tag = 'smem constant byte address 0x4 - core index']
  #allocation1 [shape = 'u32[144,128]{1,0:T(1,128)}', space=vmem, size = 0x12000, scoped, tag = 'internal scratch']
  %s0 = inlined_call_operand.hbm [shape: f32[8,256], index: 0, kind: input, shape index: {}]
  %s1 = inlined_call_operand.hbm [shape: f32[2,256], index: 1, kind: input, shape index: {}]
  %s2 = inlined_call_operand.hbm [shape: f32[8,256], index: 2, kind: output, shape index: {}]
  %s3 = sld [smem:[#allocation0]]
  $region26: #{tpu_custom_call.1} parent=0
    _
  %s5 = ssub.s32 1, %s3
  %s6 = scalar_select 0, %s5, %s3
  $region1: #{tpu_custom_call.1} parent=0
    #allocation2 [shape = 'u8[8192]{0}', space=vmem, size = 0x2000, scoped, tag = 'input window, operand 0, single buffered']
    #allocation3 [shape = 's32[1]{0}', space=sflag, size = 0x4, scoped, tag = 'scoped memory for tpu_custom_call.1']
    #allocation4 [shape = 's32[1]{0}', space=sflag, size = 0x4, scoped, tag = 'scoped memory for tpu_custom_call.1']
    #allocation5 [shape = 'u8[2048]{0}', space=vmem, size = 0x800, scoped, tag = 'input window, operand 1, single buffered']
    #allocation6 [shape = 's32[1]{0}', space=sflag, size = 0x4, scoped, tag = 'scoped memory for tpu_custom_call.1']
    #allocation7 [shape = 'u8[8192]{0}', space=vmem, size = 0x2000, scoped, tag = 'output window, operand 0, single buffered']
    %7 = vsyncpa [#allocation3], 0
    %8 = vsyncpa [#allocation6], 0
    %9 = vsyncpa [#allocation4], 0
    // Predicated region
    $region2: #{tpu_custom_call.1} parent=1 // pred_check
      _
    $region3: #{tpu_custom_call.1} parent=1 // pred_check_branch
      %11 = sbr.rel (0) target = $region5
    $region4: #{tpu_custom_call.1} parent=1 // pred_region
      %s13 = ssub.s32 256, 256
      %14 = vsyncadd [#allocation3], %s13
      %s16 = sshll.u32 [#allocation2], 4
      %s17 = int_to_ptr.vmem [resolvable:$true] %s16
      %19 = dma.hbm_to_vmem [thread:$0]  %s0, 256, %s17, [#allocation3]
    $region5: #{tpu_custom_call.1} parent=1 // pred_fallthru
      _
    // Predicated region
    $region6: #{tpu_custom_call.1} parent=1 // pred_check
      _
    $region7: #{tpu_custom_call.1} parent=1 // pred_check_branch
      %21 = sbr.rel (0) target = $region9
    $region8: #{tpu_custom_call.1} parent=1 // pred_region
      %s23 = ssub.s32 64, 64
      %24 = vsyncadd [#allocation6], %s23
      %s26 = sshll.u32 [#allocation5], 4
      %s27 = int_to_ptr.vmem [resolvable:$true] %s26
      %29 = dma.hbm_to_vmem [thread:$0]  %s1, 64, %s27, [#allocation6]
    $region9: #{tpu_custom_call.1} parent=1 // pred_fallthru
      _
    // Predicated region
    $region10: #{tpu_custom_call.1} parent=1 // pred_check
      _
    $region11: #{tpu_custom_call.1} parent=1 // pred_check_branch
      %31 = sbr.rel (0) target = $region13
    $region12: #{tpu_custom_call.1} parent=1 // pred_region
      %32 = dma.done [#allocation3], 256
    $region13: #{tpu_custom_call.1} parent=1 // pred_fallthru
      _
    // Predicated region
    $region14: #{tpu_custom_call.1} parent=1 // pred_check
      _
    $region15: #{tpu_custom_call.1} parent=1 // pred_check_branch
      %34 = sbr.rel (0) target = $region17
    $region16: #{tpu_custom_call.1} parent=1 // pred_region
      %35 = dma.done [#allocation6], 64
    $region17: #{tpu_custom_call.1} parent=1 // pred_fallthru
      _
    %v36 = vld [vmem:[#allocation2] sm:$0xff]
    %v37 = vld [vmem:[#allocation2 + $0x8] sm:$0xff]
    %v38 = vld [vmem:[#allocation5] ss:$2 sm:$0x3]
    %v40 = vlaneseq
    %v41 = vshrl.u32 %v40, 7
    %v42 = vsub.s32 0, %v41
    %v43 = vrot.slane %v38, %v42
    %v44 = vlaneseq
    %v45 = vshrl.u32 %v44, 7
    %v46 = vsub.s32 1, %v45
    %v47 = vrot.slane %v38, %v46
    %v50 = vmul.f32 %v36, %v43
    %v51 = vmul.f32 %v37, %v47
    %52 = vrot.lane.b32.xlu0 %v50, 3
    %v53 = vpop.permute.xlu0 %52
    %54 = vrot.lane.b32.xlu0 %v51, 3
    %v55 = vpop.permute.xlu0 %54
    %v56 = vlaneseq
    %v57 = vand.u32 %v56, 127
    %vm58 = vcmp.lt.s32.totalorder %v57, 3
    %v59 = vsel %vm58, %v53, %v55
    %v60 = vsel %vm58, %v55, %v53
    %s61 = scalar_lea.vmem [#allocation5], 1
    %v62 = vld [vmem:[%s61] ss:$2 sm:$0x3]
    %v64 = vlaneseq
    %v65 = vshrl.u32 %v64, 7
    %v66 = vsub.s32 0, %v65
    %v67 = vrot.slane %v62, %v66
    %v68 = vlaneseq
    %v69 = vshrl.u32 %v68, 7
    %v70 = vsub.s32 1, %v69
    %v71 = vrot.slane %v62, %v70
    %v74 = vmul.f32 %v36, %v67
    %v75 = vmul.f32 %v37, %v71
    %76 = vrot.lane.b32.xlu0 %v74, 17
    %v77 = vpop.permute.xlu0 %76
    %78 = vrot.lane.b32.xlu0 %v75, 17
    %v79 = vpop.permute.xlu0 %78
    %vm80 = vcmp.lt.s32.totalorder %v57, 17
    %v81 = vsel %vm80, %v77, %v79
    %v82 = vsel %vm80, %v79, %v77
    %v83 = vadd.f32 %v60, %v82
    %v84 = vadd.f32 %v59, %v81
    %85 = vst [vmem:[#allocation7] sm:$0xff] %v83
    %86 = vst [vmem:[#allocation7 + $0x8] sm:$0xff] %v84
    // Predicated region
    $region18: #{tpu_custom_call.1} parent=1 // pred_check
      _
    $region19: #{tpu_custom_call.1} parent=1 // pred_check_branch
      %88 = sbr.rel (0) target = $region21
    $region20: #{tpu_custom_call.1} parent=1 // pred_region
      %s90 = ssub.s32 256, 256
      %91 = vsyncadd [#allocation4], %s90
      %s93 = sshll.u32 [#allocation7], 4
      %s94 = int_to_ptr.vmem [resolvable:$true] %s93
      %96 = dma.vmem_to_hbm [thread:$0]  %s94, 256, %s2, [#allocation4]
    $region21: #{tpu_custom_call.1} parent=1 // pred_fallthru
      _
    // Predicated region
    $region22: #{tpu_custom_call.1} parent=1 // pred_check
      _
    $region23: #{tpu_custom_call.1} parent=1 // pred_check_branch
      %98 = sbr.rel (0) target = $region25
    $region24: #{tpu_custom_call.1} parent=1 // pred_region
      %99 = dma.done [#allocation4], 256
    $region25: #{tpu_custom_call.1} parent=1 // pred_fallthru
      _
    %100 = vsyncpa [#allocation3], 1
    %101 = vsyncpa [#allocation6], 1
    %102 = vsyncpa [#allocation4], 1

</llo_original>
